<compile_context>
chip_gen: v7x
topology: tpu7x:2x2x1
jax: 0.10.0
libtpu: 0.0.40
codegen_flags: <defaults>
</compile_context>

<pallas_src>
import jax
import jax.numpy as jnp
import numpy as np
from jax.experimental import pallas as pl
from jax.experimental.pallas import tpu as pltpu

LANE = 128
SUBLANE = 8


def _round_up(x, m):
    return (x + m - 1) // m * m


def _pad_axis(x, axis, target):
    pad = target - x.shape[axis]
    if pad == 0:
        return x
    widths = [(0, 0)] * x.ndim
    widths[axis] = (0, pad)
    return jnp.pad(x, widths)


def fused_tower_kernel(ids_ref, table_ref, w1_ref, b1_ref, w2_ref, b2_ref, out_ref):
    """One (tower, batch-tile) grid step: EmbeddingBag SUM pooling + 2-layer ReLU MLP.

    Pooling is expressed as a one-hot counts matmul (counts @ table), which is exactly
    EmbeddingBag sum pooling (duplicate ids counted) and runs on the MXU.  Counts are
    accumulated as exact integers and cast to bf16 once; all matmuls take bf16 inputs
    with f32 accumulation.  The tower axis is squeezed out by the BlockSpecs.
    """
    tb, L = ids_ref.shape
    Vp = table_ref.shape[0]

    ids = ids_ref[...]                                          # (tb, L) int32
    iota_v = jax.lax.broadcasted_iota(jnp.int32, (tb, Vp), 1)   # (tb, Vp), Vp lane-dense

    # Exact integer one-hot accumulation; single cast to bf16 (exact for counts <= 256).
    # TODO(synk): chunk over Vp if Vp grows (live (tb, Vp) buffer = vreg pressure at tb=256).
    counts = jnp.zeros((tb, Vp), jnp.int32)
    for l in range(L):                                          # L is small & static
        counts = counts + (ids[:, l:l + 1] == iota_v).astype(jnp.int32)
    counts_bf16 = counts.astype(jnp.bfloat16)

    # Sum-pooled embeddings: (tb, Vp)bf16 @ (Vp, D)bf16 -> (tb, D)f32; padded rows never hit.
    pooled = jnp.dot(counts_bf16, table_ref[...], preferred_element_type=jnp.float32)

    # MLP: Linear -> ReLU -> Linear -> ReLU (torchrec MLP default activation).
    # bf16 MXU inputs, f32 accumulate, f32 bias add.
    h1 = jnp.dot(pooled.astype(jnp.bfloat16), w1_ref[...],
                 preferred_element_type=jnp.float32) + b1_ref[...]
    h1 = jnp.maximum(h1, 0.0)
    h2 = jnp.dot(h1.astype(jnp.bfloat16), w2_ref[...],
                 preferred_element_type=jnp.float32) + b2_ref[...]
    h2 = jnp.maximum(h2, 0.0)                                   # (tb, H2p) — 128-lane dense

    out_ref[...] = h2.astype(out_ref.dtype)


def pack_two_tower_params(params):
    """Stack both towers along a leading axis, zero-pad to lane-friendly widths,
    and cast tables/weights to bf16 (biases stay f32 for the exact post-matmul add).

    Padding is exact: padded table rows are never selected by valid ids, and padded
    W2/b2 output columns stay 0 through ReLU and are sliced off by the wrapper.
    """
    V, D = params["q_table"].shape
    H2 = params["q_w2"].shape[1]
    Vp = _round_up(V, LANE)
    H2p = _round_up(H2, LANE)

    tables = jnp.stack([_pad_axis(params["q_table"], 0, Vp),
                        _pad_axis(params["c_table"], 0, Vp)]).astype(jnp.bfloat16)  # (2, Vp, D)
    w1 = jnp.stack([params["q_w1"], params["c_w1"]]).astype(jnp.bfloat16)           # (2, D, H1)
    b1 = jnp.stack([params["q_b1"], params["c_b1"]]).astype(jnp.float32)            # (2, 1, H1)
    w2 = jnp.stack([_pad_axis(params["q_w2"], 1, H2p),
                    _pad_axis(params["c_w2"], 1, H2p)]).astype(jnp.bfloat16)         # (2, H1, H2p)
    b2 = jnp.stack([_pad_axis(params["q_b2"], 1, H2p),
                    _pad_axis(params["c_b2"], 1, H2p)]).astype(jnp.float32)          # (2, 1, H2p)
    return {"tables": tables, "w1": w1, "b1": b1, "w2": w2, "b2": b2, "H2": H2}


def _block_bytes(shape, itemsize):
    """Tile-padded VMEM bytes for one buffered block (conservative for bf16 (16,128) tiles)."""
    s = list(shape)
    s[-2] = _round_up(s[-2], 2 * SUBLANE)
    s[-1] = _round_up(s[-1], LANE)
    return int(np.prod(s)) * itemsize


def two_tower_forward(query_ids, cand_ids, packed, *, max_batch_tile=256):
    """Fused forward for both towers. Returns (query_embedding, candidate_embedding).

    max_batch_tile: 256 matches the v6e/v7x 256x256 MXU M-dim; use 128 on v5e.
    """
    B, L = query_ids.shape
    T, Vp, D = packed["tables"].shape
    H1 = packed["w1"].shape[2]
    H2p = packed["w2"].shape[2]
    H2 = packed["H2"]

    tb = min(B, max_batch_tile)
    assert B % tb == 0
    nb = B // tb

    ids = jnp.stack([query_ids, cand_ids]).astype(jnp.int32)             # (2, B, L)

    # Right-sized VMEM request: per-step block bytes, x2 double-buffering, x4 headroom,
    # 8 MiB floor / 32 MiB cap (v7x default scoped limit is 32 of 64 MiB).
    per_step = (_block_bytes((tb, L), 4) +        # ids (int32)
                _block_bytes((Vp, D), 2) +        # table (bf16)
                _block_bytes((D, H1), 2) +        # W1 (bf16)
                _block_bytes((1, H1), 4) +        # b1 (f32)
                _block_bytes((H1, H2p), 2) +      # W2 (bf16)
                _block_bytes((1, H2p), 4) +       # b2 (f32)
                _block_bytes((tb, H2p), 4))       # out (f32)
    vmem_limit = int(min(max(4 * 2 * per_step, 8 * 1024 * 1024), 32 * 1024 * 1024))

    flops = 2 * T * B * (Vp * D + D * H1 + H1 * H2p)
    bytes_accessed = (4 * ids.size + 2 * packed["tables"].size + 2 * packed["w1"].size +
                      4 * packed["b1"].size + 2 * packed["w2"].size + 4 * packed["b2"].size +
                      4 * T * B * H2p)

    out = pl.pallas_call(
        fused_tower_kernel,
        out_shape=jax.ShapeDtypeStruct((T, B, H2p), jnp.float32),
        grid_spec=pl.GridSpec(
            # Tower axis first: on v7x the two TensorCores each take one tower.
            grid=(T, nb),
            in_specs=[
                pl.BlockSpec((None, tb, L), lambda t, b: (t, b, 0)),      # ids
                pl.BlockSpec((None, Vp, D), lambda t, b: (t, 0, 0)),      # table (per tower)
                pl.BlockSpec((None, D, H1), lambda t, b: (t, 0, 0)),      # W1
                pl.BlockSpec((None, 1, H1), lambda t, b: (t, 0, 0)),      # b1
                pl.BlockSpec((None, H1, H2p), lambda t, b: (t, 0, 0)),    # W2 (lane-padded)
                pl.BlockSpec((None, 1, H2p), lambda t, b: (t, 0, 0)),     # b2 (lane-padded)
            ],
            out_specs=pl.BlockSpec((None, tb, H2p), lambda t, b: (t, b, 0)),
        ),
        compiler_params=pltpu.CompilerParams(
            dimension_semantics=("parallel", "parallel"),
            vmem_limit_bytes=vmem_limit,
        ),
        cost_estimate=pl.CostEstimate(flops=flops, transcendentals=0,
                                      bytes_accessed=bytes_accessed),
    )(ids, packed["tables"], packed["w1"], packed["b1"], packed["w2"], packed["b2"])

    # Split the lane-dense (T, B, 128) slab back into the two 64-wide tower embeddings.
    return out[0, :, :H2], out[1, :, :H2]


def tower_ref(ids, table, w1, b1, w2, b2):
    """Pure-JAX f32 reference (matches PyTorch EmbeddingBag(sum) + MLP semantics)."""
    pooled = jnp.sum(table[ids], axis=1)                        # (B, D)
    h1 = jnp.maximum(pooled @ w1 + b1[0], 0.0)
    h2 = jnp.maximum(h1 @ w2 + b2[0], 0.0)
    return h2


if __name__ == "__main__":
    # Small, TPU-friendly shapes consistent with the module:
    #   embedding_dim = 128, layer_sizes = [128, 64]
    B, L, V, D = 16, 4, 64, 128
    H1, H2 = 128, 64

    key = jax.random.PRNGKey(0)
    ks = jax.random.split(key, 12)

    def lin_init(kw, kb, fan_in, fan_out):
        bound = 1.0 / np.sqrt(fan_in)
        w = jax.random.uniform(kw, (fan_in, fan_out), jnp.float32, -bound, bound)
        b = jax.random.uniform(kb, (1, fan_out), jnp.float32, -bound, bound)
        return w, b

    q_w1, q_b1 = lin_init(ks[0], ks[1], D, H1)
    q_w2, q_b2 = lin_init(ks[2], ks[3], H1, H2)
    c_w1, c_b1 = lin_init(ks[4], ks[5], D, H1)
    c_w2, c_b2 = lin_init(ks[6], ks[7], H1, H2)

    params = {
        "q_table": jax.random.normal(ks[8], (V, D), jnp.float32),
        "c_table": jax.random.normal(ks[9], (V, D), jnp.float32),
        "q_w1": q_w1, "q_b1": q_b1, "q_w2": q_w2, "q_b2": q_b2,
        "c_w1": c_w1, "c_b1": c_b1, "c_w2": c_w2, "c_b2": c_b2,
    }

    query_ids = jax.random.randint(ks[10], (B, L), 0, V, jnp.int32)
    cand_ids = jax.random.randint(ks[11], (B, L), 0, V, jnp.int32)

    packed = pack_two_tower_params(params)
    q_emb, c_emb = two_tower_forward(query_ids, cand_ids, packed)
    jax.block_until_ready((q_emb, c_emb))

    # Correctness check against the pure-f32 reference.  Tolerance relaxed to ~1e-2
    # relative because the kernel feeds the MXU bf16 table/weight/activation inputs
    # (f32 accumulation); pooling counts themselves are exact.
    q_ref = tower_ref(query_ids, params["q_table"], params["q_w1"], params["q_b1"],
                      params["q_w2"], params["q_b2"])
    c_ref = tower_ref(cand_ids, params["c_table"], params["c_w1"], params["c_b1"],
                      params["c_w2"], params["c_b2"])
    np.testing.assert_allclose(np.asarray(q_emb), np.asarray(q_ref), rtol=2e-2, atol=2e-2)
    np.testing.assert_allclose(np.asarray(c_emb), np.asarray(c_ref), rtol=2e-2, atol=2e-2)

    print("KERNEL_OK")
</pallas_src>

<mosaic_0001>
module attributes {stable_mosaic.version = 11 : i64} {
  func.func @fused_tower_kernel(%arg0: i32, %arg1: i32, %arg2: memref<1x16x4xi32, #tpu.memory_space<vmem>>, %arg3: memref<1x128x128xbf16, #tpu.memory_space<vmem>>, %arg4: memref<1x128x128xbf16, #tpu.memory_space<vmem>>, %arg5: memref<1x1x128xf32, #tpu.memory_space<vmem>>, %arg6: memref<1x128x128xbf16, #tpu.memory_space<vmem>>, %arg7: memref<1x1x128xf32, #tpu.memory_space<vmem>>, %arg8: memref<1x16x128xf32, #tpu.memory_space<vmem>>) attributes {dimension_semantics = [#tpu.dimension_semantics<parallel>, #tpu.dimension_semantics<parallel>], iteration_bounds = array<i64: 2, 1>, scalar_prefetch = 0 : i64, scratch_operands = 0 : i64, tpu.core_type = #tpu.core_type<tc>, window_params = [{transform_indices = @transform_0, window_bounds = array<i64: 1, 16, 4>}, {transform_indices = @transform_1, window_bounds = array<i64: 1, 128, 128>}, {transform_indices = @transform_2, window_bounds = array<i64: 1, 128, 128>}, {transform_indices = @transform_3, window_bounds = array<i64: 1, 1, 128>}, {transform_indices = @transform_4, window_bounds = array<i64: 1, 128, 128>}, {transform_indices = @transform_5, window_bounds = array<i64: 1, 1, 128>}, {transform_indices = @transform_6, window_bounds = array<i64: 1, 16, 128>}]} {
    %c0 = arith.constant 0 : index
    %c0_0 = arith.constant 0 : index
    %c0_1 = arith.constant 0 : index
    %0 = vector.load %arg2[%c0, %c0_0, %c0_1] : memref<1x16x4xi32, #tpu.memory_space<vmem>>, vector<1x16x4xi32>
    %1 = vector.shape_cast %0 : vector<1x16x4xi32> to vector<16x4xi32>
    %2 = tpu.iota {dimensions = array<i32: 1>} : vector<16x128xi32>
    %c0_i32 = arith.constant 0 : i32
    %3 = vector.broadcast %c0_i32 : i32 to vector<16x128xi32>
    %4 = vector.extract_strided_slice %1 {offsets = [0, 0], sizes = [16, 1], strides = [1, 1]} : vector<16x4xi32> to vector<16x1xi32>
    %5 = vector.broadcast %4 : vector<16x1xi32> to vector<16x128xi32>
    %6 = arith.cmpi eq, %5, %2 : vector<16x128xi32>
    %7 = arith.extui %6 : vector<16x128xi1> to vector<16x128xi32>
    %8 = arith.addi %3, %7 : vector<16x128xi32>
    %9 = vector.extract_strided_slice %1 {offsets = [0, 1], sizes = [16, 1], strides = [1, 1]} : vector<16x4xi32> to vector<16x1xi32>
    %10 = vector.broadcast %9 : vector<16x1xi32> to vector<16x128xi32>
    %11 = arith.cmpi eq, %10, %2 : vector<16x128xi32>
    %12 = arith.extui %11 : vector<16x128xi1> to vector<16x128xi32>
    %13 = arith.addi %8, %12 : vector<16x128xi32>
    %14 = vector.extract_strided_slice %1 {offsets = [0, 2], sizes = [16, 1], strides = [1, 1]} : vector<16x4xi32> to vector<16x1xi32>
    %15 = vector.broadcast %14 : vector<16x1xi32> to vector<16x128xi32>
    %16 = arith.cmpi eq, %15, %2 : vector<16x128xi32>
    %17 = arith.extui %16 : vector<16x128xi1> to vector<16x128xi32>
    %18 = arith.addi %13, %17 : vector<16x128xi32>
    %19 = vector.extract_strided_slice %1 {offsets = [0, 3], sizes = [16, 1], strides = [1, 1]} : vector<16x4xi32> to vector<16x1xi32>
    %20 = vector.broadcast %19 : vector<16x1xi32> to vector<16x128xi32>
    %21 = arith.cmpi eq, %20, %2 : vector<16x128xi32>
    %22 = arith.extui %21 : vector<16x128xi1> to vector<16x128xi32>
    %23 = arith.addi %18, %22 : vector<16x128xi32>
    %24 = arith.sitofp %23 : vector<16x128xi32> to vector<16x128xbf16>
    %c0_2 = arith.constant 0 : index
    %c0_3 = arith.constant 0 : index
    %c0_4 = arith.constant 0 : index
    %25 = vector.load %arg3[%c0_2, %c0_3, %c0_4] : memref<1x128x128xbf16, #tpu.memory_space<vmem>>, vector<1x128x128xbf16>
    %26 = vector.shape_cast %25 : vector<1x128x128xbf16> to vector<128x128xbf16>
    %cst = arith.constant dense<0.000000e+00> : vector<16x128xf32>
    %27 = tpu.matmul %24, %26, %cst {dimension_numbers = #tpu.dot_dimension_numbers<[1], [0], [0], [1], [0, 0, 1, 1], [], []>} : vector<16x128xbf16>, vector<128x128xbf16>, vector<16x128xf32> -> vector<16x128xf32>
    %28 = arith.truncf %27 : vector<16x128xf32> to vector<16x128xbf16>
    %c0_5 = arith.constant 0 : index
    %c0_6 = arith.constant 0 : index
    %c0_7 = arith.constant 0 : index
    %29 = vector.load %arg4[%c0_5, %c0_6, %c0_7] : memref<1x128x128xbf16, #tpu.memory_space<vmem>>, vector<1x128x128xbf16>
    %30 = vector.shape_cast %29 : vector<1x128x128xbf16> to vector<128x128xbf16>
    %cst_8 = arith.constant dense<0.000000e+00> : vector<16x128xf32>
    %31 = tpu.matmul %28, %30, %cst_8 {dimension_numbers = #tpu.dot_dimension_numbers<[1], [0], [0], [1], [0, 0, 1, 1], [], []>} : vector<16x128xbf16>, vector<128x128xbf16>, vector<16x128xf32> -> vector<16x128xf32>
    %c0_9 = arith.constant 0 : index
    %c0_10 = arith.constant 0 : index
    %c0_11 = arith.constant 0 : index
    %32 = vector.load %arg5[%c0_9, %c0_10, %c0_11] : memref<1x1x128xf32, #tpu.memory_space<vmem>>, vector<1x1x128xf32>
    %33 = vector.shape_cast %32 : vector<1x1x128xf32> to vector<1x128xf32>
    %34 = vector.broadcast %33 : vector<1x128xf32> to vector<16x128xf32>
    %35 = arith.addf %31, %34 : vector<16x128xf32>
    %cst_12 = arith.constant 0.000000e+00 : f32
    %36 = vector.broadcast %cst_12 : f32 to vector<16x128xf32>
    %37 = arith.maximumf %35, %36 : vector<16x128xf32>
    %38 = arith.truncf %37 : vector<16x128xf32> to vector<16x128xbf16>
    %c0_13 = arith.constant 0 : index
    %c0_14 = arith.constant 0 : index
    %c0_15 = arith.constant 0 : index
    %39 = vector.load %arg6[%c0_13, %c0_14, %c0_15] : memref<1x128x128xbf16, #tpu.memory_space<vmem>>, vector<1x128x128xbf16>
    %40 = vector.shape_cast %39 : vector<1x128x128xbf16> to vector<128x128xbf16>
    %cst_16 = arith.constant dense<0.000000e+00> : vector<16x128xf32>
    %41 = tpu.matmul %38, %40, %cst_16 {dimension_numbers = #tpu.dot_dimension_numbers<[1], [0], [0], [1], [0, 0, 1, 1], [], []>} : vector<16x128xbf16>, vector<128x128xbf16>, vector<16x128xf32> -> vector<16x128xf32>
    %c0_17 = arith.constant 0 : index
    %c0_18 = arith.constant 0 : index
    %c0_19 = arith.constant 0 : index
    %42 = vector.load %arg7[%c0_17, %c0_18, %c0_19] : memref<1x1x128xf32, #tpu.memory_space<vmem>>, vector<1x1x128xf32>
    %43 = vector.shape_cast %42 : vector<1x1x128xf32> to vector<1x128xf32>
    %44 = vector.broadcast %43 : vector<1x128xf32> to vector<16x128xf32>
    %45 = arith.addf %41, %44 : vector<16x128xf32>
    %cst_20 = arith.constant 0.000000e+00 : f32
    %46 = vector.broadcast %cst_20 : f32 to vector<16x128xf32>
    %47 = arith.maximumf %45, %46 : vector<16x128xf32>
    %c0_21 = arith.constant 0 : index
    %c0_22 = arith.constant 0 : index
    %c0_23 = arith.constant 0 : index
    %48 = vector.load %arg8[%c0_21, %c0_22, %c0_23] : memref<1x16x128xf32, #tpu.memory_space<vmem>>, vector<1x16x128xf32>
    %49 = vector.shape_cast %48 : vector<1x16x128xf32> to vector<16x128xf32>
    %50 = vector.shape_cast %47 : vector<16x128xf32> to vector<1x16x128xf32>
    tpu.vector_store %arg8[%c0_21, %c0_22, %c0_23], %50 {strides = array<i32>} : memref<1x16x128xf32, #tpu.memory_space<vmem>>, vector<1x16x128xf32>,
    return
  }
  func.func @transform_0(%arg0: i32, %arg1: i32) -> (i32, i32, i32) {
    %c0_i32 = arith.constant 0 : i32
    %c0_i32_0 = arith.constant 0 : i32
    return %arg0, %arg1, %c0_i32 : i32, i32, i32
  }
  func.func @transform_1(%arg0: i32, %arg1: i32) -> (i32, i32, i32) {
    %c0_i32 = arith.constant 0 : i32
    %c0_i32_0 = arith.constant 0 : i32
    %c0_i32_1 = arith.constant 0 : i32
    return %arg0, %c0_i32, %c0_i32_0 : i32, i32, i32
  }
  func.func @transform_2(%arg0: i32, %arg1: i32) -> (i32, i32, i32) {
    %c0_i32 = arith.constant 0 : i32
    %c0_i32_0 = arith.constant 0 : i32
    %c0_i32_1 = arith.constant 0 : i32
    return %arg0, %c0_i32, %c0_i32_0 : i32, i32, i32
  }
  func.func @transform_3(%arg0: i32, %arg1: i32) -> (i32, i32, i32) {
    %c0_i32 = arith.constant 0 : i32
    %c0_i32_0 = arith.constant 0 : i32
    %c0_i32_1 = arith.constant 0 : i32
    return %arg0, %c0_i32, %c0_i32_0 : i32, i32, i32
  }
  func.func @transform_4(%arg0: i32, %arg1: i32) -> (i32, i32, i32) {
    %c0_i32 = arith.constant 0 : i32
    %c0_i32_0 = arith.constant 0 : i32
    %c0_i32_1 = arith.constant 0 : i32
    return %arg0, %c0_i32, %c0_i32_0 : i32, i32, i32
  }
  func.func @transform_5(%arg0: i32, %arg1: i32) -> (i32, i32, i32) {
    %c0_i32 = arith.constant 0 : i32
    %c0_i32_0 = arith.constant 0 : i32
    %c0_i32_1 = arith.constant 0 : i32
    return %arg0, %c0_i32, %c0_i32_0 : i32, i32, i32
  }
  func.func @transform_6(%arg0: i32, %arg1: i32) -> (i32, i32, i32) {
    %c0_i32 = arith.constant 0 : i32
    %c0_i32_0 = arith.constant 0 : i32
    return %arg0, %arg1, %c0_i32 : i32, i32, i32
  }
}

</mosaic_0001>

<llo_original>
// kernel: tpu_custom_call.1
$region0: #{tpu_custom_call.1}
  #allocation0 [shape = 'u32[]', space=smem, size = 0x4, offset = 0x4, fixed_abs, tag = 'smem constant byte address 0x4 - core index']
  #allocation1 [shape = 'u32[144,128]{1,0:T(1,128)}', space=vmem, size = 0x12000, scoped, tag = 'internal scratch']
  %s0 = inlined_call_operand.vmem [shape: s32[2,16,4], index: 0, kind: input, shape index: {}]
  %s1 = inlined_call_operand.hbm [shape: bf16[2,128,128], index: 1, kind: input, shape index: {}]
  %s2 = inlined_call_operand.hbm [shape: bf16[2,128,128], index: 2, kind: input, shape index: {}]
  %s3 = inlined_call_operand.vmem [shape: f32[2,1,128], index: 3, kind: input, shape index: {}]
  %s4 = inlined_call_operand.hbm [shape: bf16[2,128,128], index: 4, kind: input, shape index: {}]
  %s5 = inlined_call_operand.vmem [shape: f32[2,1,128], index: 5, kind: input, shape index: {}]
  %s6 = inlined_call_operand.hbm [shape: f32[2,16,128], index: 6, kind: output, shape index: {}]
  %s7 = sld [smem:[#allocation0]]
  $region69: #{tpu_custom_call.1} parent=0
    _
  %s9 = ssub.s32 1, %s7
  %s10 = scalar_select 0, %s9, %s7
  $region1: #{tpu_custom_call.1} parent=0
    #allocation2 [shape = 'u8[65536]{0}', space=vmem, size = 0x10000, scoped, tag = 'input window, operand 1']
    #allocation3 [shape = 's32[2]{0}', space=sflag, size = 0x8, scoped, tag = 'scoped memory for tpu_custom_call.1']
    #allocation4 [shape = 's32[2]{0}', space=sflag, size = 0x8, scoped, tag = 'scoped memory for tpu_custom_call.1']
    #allocation5 [shape = 'u8[65536]{0}', space=vmem, size = 0x10000, scoped, tag = 'input window, operand 2']
    #allocation6 [shape = 's32[2]{0}', space=sflag, size = 0x8, scoped, tag = 'scoped memory for tpu_custom_call.1']
    #allocation7 [shape = 'u8[65536]{0}', space=vmem, size = 0x10000, scoped, tag = 'input window, operand 4']
    #allocation8 [shape = 'u8[16384]{0}', space=vmem, size = 0x4000, scoped, tag = 'output window, operand 0']
    %11 = vsyncpa [#allocation3], 0
    %s12 = scalar_lea.sflag [#allocation3], 1
    %13 = vsyncpa %s12, 0
    %14 = vsyncpa [#allocation6], 0
    %s15 = scalar_lea.sflag [#allocation6], 1
    %16 = vsyncpa %s15, 0
    %17 = vsyncpa [#allocation4], 0
    %s18 = scalar_lea.sflag [#allocation4], 1
    %19 = vsyncpa %s18, 0
    loop: start=0, step=1, limit=4
    $region2: #{tpu_custom_call.1} parent=1 // loop_pre_header
      _
    $region3: #{tpu_custom_call.1} parent=1 // loop_header
      %s21 = sphi 0, %s25
      %p22 = scmp.ge.s32.totalorder %s21, 4
      %s28 = sphi 0, %s40
      %s29 = sphi 0, %s36
      %s30 = sphi 0, %s28
      %s31 = sphi 0, %s29
      %s32 = sphi 0, %s30
      %s33 = sphi 0, %s31
      %s45 = sphi 0, %s47
      %s48 = sphi 0, %s45
      %s49 = sphi 0, %s48
      %s65 = sphi 0, %s49
      %s71 = sphi 0, %s73
      %s74 = sphi 0, %s71
      %s75 = sphi 0, %s74
      %s91 = sphi 0, %s75
      %s97 = sphi 0, %s99
      %s100 = sphi 0, %s97
      %s101 = sphi 0, %s100
      %s117 = sphi 0, %s101
      %s123 = sphi 0, %s125
      %s126 = sphi 0, %s123
      %s127 = sphi 0, %s126
      %s143 = sphi 0, %s127
      %s149 = sphi 0, %s151
      %s152 = sphi 0, %s149
      %s153 = sphi 0, %s152
      %s169 = sphi 0, %s153
      %s175 = sphi 0, %s177
      %s178 = sphi 0, %s175
      %s179 = sphi 0, %s178
      %s195 = sphi 0, %s179
      %s203 = sphi 0, %s205
      %s206 = sphi 0, %s203
      %s207 = sphi 0, %s206
      %s223 = sphi 0, %s207
    $region4: #{tpu_custom_call.1} parent=1 // loop_header_branch
      %24 = sbr.rel (%p22) target = $region8
    $region5: #{tpu_custom_call.1} parent=1 // loop_body
      %s26 = ssub.s32 %s21, 1
      %s27 = ssub.s32 %s21, 2
      %s34 = sadd.s32 1, %s29
      %p35 = scmp.ge.s32.totalorder %s34, 1
      %s36 = scalar_select %p35, 0, %s34
      %s37 = sadd.s32 1, %s28
      %s38 = scalar_select %p35, %s37, %s28
      %p39 = scmp.ge.s32.totalorder %s38, 2
      %s40 = scalar_select %p39, 0, %s38
      %s41 = ssub.s32 %s28, %s40
      %s42 = ssub.s32 %s29, %s36
      %s43 = sor.u32 %s41, %s42
      %p44 = scmp.eq.s32.totalorder %s43, 0
      %s46 = sadd.s32 %s45, 1
      %s47 = scalar_select %p44, %s45, %s46
      %p50 = pneg %p44
      %p51 = scmp.eq.s32.totalorder %s21, 1
      %p52 = por %p50, %p51
      %p53 = scmp.ne.s32.totalorder %s45, %s48
      %p54 = scmp.eq.s32.totalorder %s21, 0
      %p55 = por %p53, %p54
      %p56 = scmp.ne.s32.totalorder %s45, %s48
      %p57 = scmp.eq.s32.totalorder %s26, 1
      %p58 = por %p56, %p57
      %p59 = scmp.ne.s32.totalorder %s48, %s49
      %p60 = scmp.eq.s32.totalorder %s26, 0
      %p61 = por %p59, %p60
      %p62 = scmp.ne.s32.totalorder %s48, %s49
      %p63 = scmp.eq.s32.totalorder %s27, 1
      %p64 = por %p62, %p63
      %p66 = scmp.ne.s32.totalorder %s49, %s65
      %p67 = scmp.eq.s32.totalorder %s27, 0
      %p68 = por %p66, %p67
      %s69 = ssub.s32 %s28, %s40
      %p70 = scmp.eq.s32.totalorder %s69, 0
      %s72 = sadd.s32 %s71, 1
      %s73 = scalar_select %p70, %s71, %s72
      %p76 = pneg %p70
      %p77 = scmp.eq.s32.totalorder %s21, 1
      %p78 = por %p76, %p77
      %p79 = scmp.ne.s32.totalorder %s71, %s74
      %p80 = scmp.eq.s32.totalorder %s21, 0
      %p81 = por %p79, %p80
      %p82 = scmp.ne.s32.totalorder %s71, %s74
      %p83 = scmp.eq.s32.totalorder %s26, 1
      %p84 = por %p82, %p83
      %p85 = scmp.ne.s32.totalorder %s74, %s75
      %p86 = scmp.eq.s32.totalorder %s26, 0
      %p87 = por %p85, %p86
      %p88 = scmp.ne.s32.totalorder %s74, %s75
      %p89 = scmp.eq.s32.totalorder %s27, 1
      %p90 = por %p88, %p89
      %p92 = scmp.ne.s32.totalorder %s75, %s91
      %p93 = scmp.eq.s32.totalorder %s27, 0
      %p94 = por %p92, %p93
      %s95 = ssub.s32 %s28, %s40
      %p96 = scmp.eq.s32.totalorder %s95, 0
      %s98 = sadd.s32 %s97, 1
      %s99 = scalar_select %p96, %s97, %s98
      %p102 = pneg %p96
      %p103 = scmp.eq.s32.totalorder %s21, 1
      %p104 = por %p102, %p103
      %p105 = scmp.ne.s32.totalorder %s97, %s100
      %p106 = scmp.eq.s32.totalorder %s21, 0
      %p107 = por %p105, %p106
      %p108 = scmp.ne.s32.totalorder %s97, %s100
      %p109 = scmp.eq.s32.totalorder %s26, 1
      %p110 = por %p108, %p109
      %p111 = scmp.ne.s32.totalorder %s100, %s101
      %p112 = scmp.eq.s32.totalorder %s26, 0
      %p113 = por %p111, %p112
      %p114 = scmp.ne.s32.totalorder %s100, %s101
      %p115 = scmp.eq.s32.totalorder %s27, 1
      %p116 = por %p114, %p115
      %p118 = scmp.ne.s32.totalorder %s101, %s117
      %p119 = scmp.eq.s32.totalorder %s27, 0
      %p120 = por %p118, %p119
      %s121 = ssub.s32 %s28, %s40
      %p122 = scmp.eq.s32.totalorder %s121, 0
      %s124 = sadd.s32 %s123, 1
      %s125 = scalar_select %p122, %s123, %s124
      %p128 = pneg %p122
      %p129 = scmp.eq.s32.totalorder %s21, 1
      %p130 = por %p128, %p129
      %p131 = scmp.ne.s32.totalorder %s123, %s126
      %p132 = scmp.eq.s32.totalorder %s21, 0
      %p133 = por %p131, %p132
      %p134 = scmp.ne.s32.totalorder %s123, %s126
      %p135 = scmp.eq.s32.totalorder %s26, 1
      %p136 = por %p134, %p135
      %p137 = scmp.ne.s32.totalorder %s126, %s127
      %p138 = scmp.eq.s32.totalorder %s26, 0
      %p139 = por %p137, %p138
      %p140 = scmp.ne.s32.totalorder %s126, %s127
      %p141 = scmp.eq.s32.totalorder %s27, 1
      %p142 = por %p140, %p141
      %p144 = scmp.ne.s32.totalorder %s127, %s143
      %p145 = scmp.eq.s32.totalorder %s27, 0
      %p146 = por %p144, %p145
      %s147 = ssub.s32 %s28, %s40
      %p148 = scmp.eq.s32.totalorder %s147, 0
      %s150 = sadd.s32 %s149, 1
      %s151 = scalar_select %p148, %s149, %s150
      %p154 = pneg %p148
      %p155 = scmp.eq.s32.totalorder %s21, 1
      %p156 = por %p154, %p155
      %p157 = scmp.ne.s32.totalorder %s149, %s152
      %p158 = scmp.eq.s32.totalorder %s21, 0
      %p159 = por %p157, %p158
      %p160 = scmp.ne.s32.totalorder %s149, %s152
      %p161 = scmp.eq.s32.totalorder %s26, 1
      %p162 = por %p160, %p161
      %p163 = scmp.ne.s32.totalorder %s152, %s153
      %p164 = scmp.eq.s32.totalorder %s26, 0
      %p165 = por %p163, %p164
      %p166 = scmp.ne.s32.totalorder %s152, %s153
      %p167 = scmp.eq.s32.totalorder %s27, 1
      %p168 = por %p166, %p167
      %p170 = scmp.ne.s32.totalorder %s153, %s169
      %p171 = scmp.eq.s32.totalorder %s27, 0
      %p172 = por %p170, %p171
      %s173 = ssub.s32 %s28, %s40
      %p174 = scmp.eq.s32.totalorder %s173, 0
      %s176 = sadd.s32 %s175, 1
      %s177 = scalar_select %p174, %s175, %s176
      %p180 = pneg %p174
      %p181 = scmp.eq.s32.totalorder %s21, 1
      %p182 = por %p180, %p181
      %p183 = scmp.ne.s32.totalorder %s175, %s178
      %p184 = scmp.eq.s32.totalorder %s21, 0
      %p185 = por %p183, %p184
      %p186 = scmp.ne.s32.totalorder %s175, %s178
      %p187 = scmp.eq.s32.totalorder %s26, 1
      %p188 = por %p186, %p187
      %p189 = scmp.ne.s32.totalorder %s178, %s179
      %p190 = scmp.eq.s32.totalorder %s26, 0
      %p191 = por %p189, %p190
      %p192 = scmp.ne.s32.totalorder %s178, %s179
      %p193 = scmp.eq.s32.totalorder %s27, 1
      %p194 = por %p192, %p193
      %p196 = scmp.ne.s32.totalorder %s179, %s195
      %p197 = scmp.eq.s32.totalorder %s27, 0
      %p198 = por %p196, %p197
      %s199 = ssub.s32 %s28, %s40
      %s200 = ssub.s32 %s29, %s36
      %s201 = sor.u32 %s199, %s200
      %p202 = scmp.eq.s32.totalorder %s201, 0
      %s204 = sadd.s32 %s203, 1
      %s205 = scalar_select %p202, %s203, %s204
      %p208 = pneg %p202
      %p209 = scmp.eq.s32.totalorder %s21, 1
      %p210 = por %p208, %p209
      %p211 = scmp.ne.s32.totalorder %s203, %s206
      %p212 = scmp.eq.s32.totalorder %s21, 0
      %p213 = por %p211, %p212
      %p214 = scmp.ne.s32.totalorder %s203, %s206
      %p215 = scmp.eq.s32.totalorder %s26, 1
      %p216 = por %p214, %p215
      %p217 = scmp.ne.s32.totalorder %s206, %s207
      %p218 = scmp.eq.s32.totalorder %s26, 0
      %p219 = por %p217, %p218
      %p220 = scmp.ne.s32.totalorder %s206, %s207
      %p221 = scmp.eq.s32.totalorder %s27, 1
      %p222 = por %p220, %p221
      %p224 = scmp.ne.s32.totalorder %s207, %s223
      %p225 = scmp.eq.s32.totalorder %s27, 0
      %p226 = por %p224, %p225
      %p227 = scmp.le.s32.totalorder 1, %s21
      %p228 = scmp.lt.s32.totalorder %s21, 3
      %p229 = pnand %p227, %p228
      %p230 = pneg %p229
      // Predicated region
      $region9: #{tpu_custom_call.1} parent=5 // pred_check
        _
      $region10: #{tpu_custom_call.1} parent=5 // pred_check_branch
        %232 = sbr.rel (%p229) target = $region12
      $region11: #{tpu_custom_call.1} parent=5 // pred_region
        %s233 = ssub.s32 %s21, 1
      $region12: #{tpu_custom_call.1} parent=5 // pred_fallthru
        _
      %p234 = scmp.lt.s32.totalorder %s21, 2
      // Predicated region
      $region13: #{tpu_custom_call.1} parent=5 // pred_check
        %p235 = pneg %p234
      $region14: #{tpu_custom_call.1} parent=5 // pred_check_branch
        %237 = sbr.rel (%p235) target = $region16
      $region15: #{tpu_custom_call.1} parent=5 // pred_region
        // Predicated region
        $region17: #{tpu_custom_call.1} parent=15 // pred_check
          %p238 = pneg %p55
        $region18: #{tpu_custom_call.1} parent=15 // pred_check_branch
          %240 = sbr.rel (%p238) target = $region20
        $region19: #{tpu_custom_call.1} parent=15 // pred_region
          %s241 = smul.u32 2, %s29
          %p242 = scmp.lt.s32.totalorder %s28, 1
          %s243 = scalar_select %p242, %s28, 1
          %p244 = scmp.lt.s32.totalorder %s241, 1
          %s245 = scalar_select %p244, %s241, 1
          %s246 = smul.addr %s243, 2
          %s247 = sadd.s32 %s245, %s246
          %s248 = smul.addr %s247, 8
          %s249 = scalar_lea.vmem %s0, %s248
          %s250 = smul.u32 2, %s29
        $region20: #{tpu_custom_call.1} parent=15 // pred_fallthru
          _
        // Predicated region
        $region21: #{tpu_custom_call.1} parent=15 // pred_check
          %p251 = pneg %p81
        $region22: #{tpu_custom_call.1} parent=15 // pred_check_branch
          %253 = sbr.rel (%p251) target = $region24
        $region23: #{tpu_custom_call.1} parent=15 // pred_region
          %s254 = sand.u32 %s71, 1
          %s255 = scalar_lea.sflag [#allocation3], %s254
          %s256 = sand.u32 %s71, 1
          %s257 = smul.addr %s256, 64
          %s258 = scalar_lea.vmem [#allocation2], %s257
          %s260 = ssub.s32 1024, 1024
          %261 = vsyncadd %s255, %s260
          %s262 = smul.addr %s28, 16
          %s263 = smul.addr %s262, 64
          %s264 = scalar_lea.hbm %s1, %s263
          %s265 = sshll.u32 %s258, 4
          %s266 = int_to_ptr.vmem [resolvable:$true] %s265
          %271 = dma.hbm_to_vmem [thread:$0]  %s264, 1024, %s266, %s255, 64, 64, 4
        $region24: #{tpu_custom_call.1} parent=15 // pred_fallthru
          _
        // Predicated region
        $region25: #{tpu_custom_call.1} parent=15 // pred_check
          %p272 = pneg %p107
        $region26: #{tpu_custom_call.1} parent=15 // pred_check_branch
          %274 = sbr.rel (%p272) target = $region28
        $region27: #{tpu_custom_call.1} parent=15 // pred_region
          %s275 = sand.u32 %s21, 1
          %s276 = scalar_lea.sflag [#allocation6], %s275
          %s277 = sand.u32 %s97, 1
          %s278 = smul.addr %s277, 64
          %s279 = scalar_lea.vmem [#allocation5], %s278
          %s281 = ssub.s32 1024, 1024
          %282 = vsyncadd %s276, %s281
          %s283 = smul.addr %s28, 16
          %s284 = smul.addr %s283, 64
          %s285 = scalar_lea.hbm %s2, %s284
          %s286 = sshll.u32 %s279, 4
          %s287 = int_to_ptr.vmem [resolvable:$true] %s286
          %292 = dma.hbm_to_vmem [thread:$0]  %s285, 1024, %s287, %s276, 64, 64, 4
        $region28: #{tpu_custom_call.1} parent=15 // pred_fallthru
          _
        // Predicated region
        $region29: #{tpu_custom_call.1} parent=15 // pred_check
          %p293 = pneg %p133
        $region30: #{tpu_custom_call.1} parent=15 // pred_check_branch
          %295 = sbr.rel (%p293) target = $region32
        $region31: #{tpu_custom_call.1} parent=15 // pred_region
          %p296 = scmp.lt.s32.totalorder %s28, 1
          %s297 = scalar_select %p296, %s28, 1
          %s298 = scalar_lea.vmem %s3, %s297
        $region32: #{tpu_custom_call.1} parent=15 // pred_fallthru
          _
        // Predicated region
        $region33: #{tpu_custom_call.1} parent=15 // pred_check
          %p299 = pneg %p159
        $region34: #{tpu_custom_call.1} parent=15 // pred_check_branch
          %301 = sbr.rel (%p299) target = $region36
        $region35: #{tpu_custom_call.1} parent=15 // pred_region
          %s302 = sand.u32 %s21, 1
          %s303 = scalar_lea.sflag [#allocation6], %s302
          %s304 = sand.u32 %s149, 1
          %s305 = smul.addr %s304, 64
          %s306 = scalar_lea.vmem [#allocation7], %s305
          %s308 = ssub.s32 1024, 1024
          %309 = vsyncadd %s303, %s308
          %s310 = smul.addr %s28, 16
          %s311 = smul.addr %s310, 64
          %s312 = scalar_lea.hbm %s4, %s311
          %s313 = sshll.u32 %s306, 4
          %s314 = int_to_ptr.vmem [resolvable:$true] %s313
          %319 = dma.hbm_to_vmem [thread:$0]  %s312, 1024, %s314, %s303, 64, 64, 4
        $region36: #{tpu_custom_call.1} parent=15 // pred_fallthru
          _
        // Predicated region
        $region37: #{tpu_custom_call.1} parent=15 // pred_check
          %p320 = pneg %p185
        $region38: #{tpu_custom_call.1} parent=15 // pred_check_branch
          %322 = sbr.rel (%p320) target = $region40
        $region39: #{tpu_custom_call.1} parent=15 // pred_region
          %p323 = scmp.lt.s32.totalorder %s28, 1
          %s324 = scalar_select %p323, %s28, 1
          %s325 = scalar_lea.vmem %s5, %s324
        $region40: #{tpu_custom_call.1} parent=15 // pred_fallthru
          _
      $region16: #{tpu_custom_call.1} parent=5 // pred_fallthru
        _
      %p326 = scmp.le.s32.totalorder 1, %s21
      %p327 = scmp.lt.s32.totalorder %s21, 3
      %p328 = pnand %p326, %p327
      %p329 = pneg %p328
      // Predicated region
      $region41: #{tpu_custom_call.1} parent=5 // pred_check
        _
      $region42: #{tpu_custom_call.1} parent=5 // pred_check_branch
        %331 = sbr.rel (%p328) target = $region44
      $region43: #{tpu_custom_call.1} parent=5 // pred_region
        %s332 = ssub.s32 %s21, 1
        %s333 = sand.u32 %s74, 1
        %s334 = scalar_lea.sflag [#allocation3], %s333
        %s335 = sand.u32 %s74, 1
        %s336 = smul.addr %s335, 64
        %s337 = scalar_lea.vmem [#allocation2], %s336
        // Predicated region
        $region45: #{tpu_custom_call.1} parent=43 // pred_check
          %p338 = pneg %p87
        $region46: #{tpu_custom_call.1} parent=43 // pred_check_branch
          %340 = sbr.rel (%p338) target = $region48
        $region47: #{tpu_custom_call.1} parent=43 // pred_region
          %341 = dma.done %s334, 1024
        $region48: #{tpu_custom_call.1} parent=43 // pred_fallthru
          _
        %s342 = sand.u32 %s26, 1
        %s343 = scalar_lea.sflag [#allocation6], %s342
        %s344 = sand.u32 %s100, 1
        %s345 = smul.addr %s344, 64
        %s346 = scalar_lea.vmem [#allocation5], %s345
        // Predicated region
        $region49: #{tpu_custom_call.1} parent=43 // pred_check
          %p347 = pneg %p113
        $region50: #{tpu_custom_call.1} parent=43 // pred_check_branch
          %349 = sbr.rel (%p347) target = $region52
        $region51: #{tpu_custom_call.1} parent=43 // pred_region
          %350 = dma.done %s343, 1024
        $region52: #{tpu_custom_call.1} parent=43 // pred_fallthru
          _
        %s351 = sand.u32 %s26, 1
        %s352 = scalar_lea.sflag [#allocation6], %s351
        %s353 = sand.u32 %s152, 1
        %s354 = smul.addr %s353, 64
        %s355 = scalar_lea.vmem [#allocation7], %s354
        // Predicated region
        $region53: #{tpu_custom_call.1} parent=43 // pred_check
          %p356 = pneg %p165
        $region54: #{tpu_custom_call.1} parent=43 // pred_check_branch
          %358 = sbr.rel (%p356) target = $region56
        $region55: #{tpu_custom_call.1} parent=43 // pred_region
          %359 = dma.done %s352, 1024
        $region56: #{tpu_custom_call.1} parent=43 // pred_fallthru
          _
        %s360 = smul.u32 2, %s31
        %p361 = scmp.lt.s32.totalorder %s30, 1
        %s362 = scalar_select %p361, %s30, 1
        %p363 = scmp.lt.s32.totalorder %s360, 1
        %s364 = scalar_select %p363, %s360, 1
        %s365 = smul.addr %s362, 2
        %s366 = sadd.s32 %s364, %s365
        %s367 = smul.addr %s366, 8
        %s368 = scalar_lea.vmem %s0, %s367
        %p369 = pneg %p61
        %p370 = pneg %p58
        %s371 = sand.u32 %s74, 1
        %s372 = scalar_lea.sflag [#allocation3], %s371
        %s373 = sand.u32 %s74, 1
        %s374 = smul.addr %s373, 64
        %s375 = scalar_lea.vmem [#allocation2], %s374
        %p376 = pneg %p87
        %p377 = pneg %p84
        %s378 = sand.u32 %s26, 1
        %s379 = scalar_lea.sflag [#allocation6], %s378
        %s380 = sand.u32 %s100, 1
        %s381 = smul.addr %s380, 64
        %s382 = scalar_lea.vmem [#allocation5], %s381
        %p383 = pneg %p113
        %p384 = pneg %p110
        %p385 = scmp.lt.s32.totalorder %s30, 1
        %s386 = scalar_select %p385, %s30, 1
        %s387 = scalar_lea.vmem %s3, %s386
        %p388 = pneg %p139
        %p389 = pneg %p136
        %s390 = sand.u32 %s26, 1
        %s391 = scalar_lea.sflag [#allocation6], %s390
        %s392 = sand.u32 %s152, 1
        %s393 = smul.addr %s392, 64
        %s394 = scalar_lea.vmem [#allocation7], %s393
        %p395 = pneg %p165
        %p396 = pneg %p162
        %p397 = scmp.lt.s32.totalorder %s30, 1
        %s398 = scalar_select %p397, %s30, 1
        %s399 = scalar_lea.vmem %s5, %s398
        %p400 = pneg %p191
        %p401 = pneg %p188
        %p402 = pneg %p219
        %p403 = pneg %p216
        %s404 = sand.u32 %s206, 1
        %s405 = scalar_lea.sflag [#allocation4], %s404
        %s406 = sand.u32 %s206, 1
        %s407 = smul.addr %s406, 16
        %s408 = scalar_lea.vmem [#allocation8], %s407
        %s409 = smul.u32 2, %s31
        %p410 = scmp.lt.s32.totalorder %s30, 1
        %s411 = scalar_select %p410, %s30, 1
        %p412 = scmp.lt.s32.totalorder %s409, 1
        %s413 = scalar_select %p412, %s409, 1
        %s414 = smul.addr %s411, 2
        %s415 = sadd.s32 %s413, %s414
        %s416 = smul.addr %s415, 8
        %s417 = scalar_lea.vmem %s0, %s416
        %s418 = smul.u32 2, %s31
        %p419 = scmp.lt.s32.totalorder %s30, 1
        %s420 = scalar_select %p419, %s30, 1
        %s421 = scalar_lea.vmem %s3, %s420
        %p422 = scmp.lt.s32.totalorder %s30, 1
        %s423 = scalar_select %p422, %s30, 1
        %s424 = scalar_lea.vmem %s5, %s423
        %s425 = smul.u32 2, %s31
        %v427 = vld [vmem:[%s417] sm:$0xff]
        %v428 = vld [vmem:[%s417 + $0x8] sm:$0xff]
        %v429 = vlaneseq
        %v430 = vand.u32 %v429, 127
        %431 = vset.pattern.permute.xlu0 0
        %432 = vperm.xlu0 %431, %v427
        %v433 = vpop.permute.xlu0 %432
        %434 = vset.pattern.permute.xlu0 0
        %435 = vperm.xlu0 %434, %v428
        %v436 = vpop.permute.xlu0 %435
        %vm437 = vcmp.eq.s32.totalorder %v433, %v430
        %vm438 = vcmp.eq.s32.totalorder %v436, %v430
        %v439 = vsel %vm437, 1, 0
        %v440 = vsel %vm438, 1, 0
        %441 = vset.pattern.permute.xlu0 1
        %442 = vperm.xlu0 %441, %v427
        %v443 = vpop.permute.xlu0 %442
        %444 = vset.pattern.permute.xlu0 1
        %445 = vperm.xlu0 %444, %v428
        %v446 = vpop.permute.xlu0 %445
        %vm447 = vcmp.eq.s32.totalorder %v443, %v430
        %vm448 = vcmp.eq.s32.totalorder %v446, %v430
        %v449 = vsel %vm447, 1, 0
        %v450 = vsel %vm448, 1, 0
        %v451 = vadd.s32 %v439, %v449
        %v452 = vadd.s32 %v440, %v450
        %453 = vset.pattern.permute.xlu0 2
        %454 = vperm.xlu0 %453, %v427
        %v455 = vpop.permute.xlu0 %454
        %456 = vset.pattern.permute.xlu0 2
        %457 = vperm.xlu0 %456, %v428
        %v458 = vpop.permute.xlu0 %457
        %vm459 = vcmp.eq.s32.totalorder %v455, %v430
        %vm460 = vcmp.eq.s32.totalorder %v458, %v430
        %v461 = vsel %vm459, 1, 0
        %v462 = vsel %vm460, 1, 0
        %v463 = vadd.s32 %v451, %v461
        %v464 = vadd.s32 %v452, %v462
        %465 = vset.pattern.permute.xlu0 3
        %466 = vperm.xlu0 %465, %v427
        %v467 = vpop.permute.xlu0 %466
        %468 = vset.pattern.permute.xlu0 3
        %469 = vperm.xlu0 %468, %v428
        %v470 = vpop.permute.xlu0 %469
        %vm471 = vcmp.eq.s32.totalorder %v467, %v430
        %vm472 = vcmp.eq.s32.totalorder %v470, %v430
        %v473 = vsel %vm471, 1, 0
        %v474 = vsel %vm472, 1, 0
        %v475 = vadd.s32 %v463, %v473
        %v476 = vadd.s32 %v464, %v474
        %v477 = vcvt.s32.f32 %v475
        %v478 = vcvt.s32.f32 %v476
        %v479 = vpack.c.bf16 %v478, %v477
        %v480 = vld [vmem:[%s337] sm:$0xf]
        %v481 = vld [vmem:[%s337 + $0x4] sm:$0xf]
        %v482 = vld [vmem:[%s337 + $0x8] sm:$0xf]
        %v483 = vld [vmem:[%s337 + $0xc] sm:$0xf]
        %v484 = vld [vmem:[%s337 + $0x10] sm:$0xf]
        %v485 = vld [vmem:[%s337 + $0x14] sm:$0xf]
        %v486 = vld [vmem:[%s337 + $0x18] sm:$0xf]
        %v487 = vld [vmem:[%s337 + $0x1c] sm:$0xf]
        %v488 = vld [vmem:[%s337 + $0x20] sm:$0xf]
        %v489 = vld [vmem:[%s337 + $0x24] sm:$0xf]
        %v490 = vld [vmem:[%s337 + $0x28] sm:$0xf]
        %v491 = vld [vmem:[%s337 + $0x2c] sm:$0xf]
        %v492 = vld [vmem:[%s337 + $0x30] sm:$0xf]
        %v493 = vld [vmem:[%s337 + $0x34] sm:$0xf]
        %v494 = vld [vmem:[%s337 + $0x38] sm:$0xf]
        %v495 = vld [vmem:[%s337 + $0x3c] sm:$0xf]
        %v512 = vunpack.c.l.b16 %v480
        %v513 = vunpack.c.l.b16 %v481
        %v514 = vunpack.c.l.b16 %v482
        %v515 = vunpack.c.l.b16 %v483
        %v516 = vunpack.c.l.b16 %v484
        %v517 = vunpack.c.l.b16 %v485
        %v518 = vunpack.c.l.b16 %v486
        %v519 = vunpack.c.l.b16 %v487
        %v520 = vunpack.c.l.b16 %v488
        %v521 = vunpack.c.l.b16 %v489
        %v522 = vunpack.c.l.b16 %v490
        %v523 = vunpack.c.l.b16 %v491
        %v524 = vunpack.c.l.b16 %v492
        %v525 = vunpack.c.l.b16 %v493
        %v526 = vunpack.c.l.b16 %v494
        %v527 = vunpack.c.l.b16 %v495
        %v528 = vpack.c.b16 %v513, %v512
        %v529 = vpack.c.b16 %v515, %v514
        %v530 = vpack.c.b16 %v517, %v516
        %v531 = vpack.c.b16 %v519, %v518
        %v532 = vpack.c.b16 %v521, %v520
        %v533 = vpack.c.b16 %v523, %v522
        %v534 = vpack.c.b16 %v525, %v524
        %v535 = vpack.c.b16 %v527, %v526
        %544 = vmatprep.subr.bf16.mxu0 0
        %545 = vmatpush1.bf16.msra.mxu0 %v528
        %546 = vmatprep.subr.bf16.mxu0 0
        %547 = vmatpush1.bf16.msra.mxu0 %v529
        %548 = vmatprep.subr.bf16.mxu0 0
        %549 = vmatpush1.bf16.msra.mxu0 %v530
        %550 = vmatprep.subr.bf16.mxu0 0
        %551 = vmatpush1.bf16.msra.mxu0 %v531
        %552 = vmatprep.subr.bf16.mxu0 0
        %553 = vmatpush1.bf16.msra.mxu0 %v532
        %554 = vmatprep.subr.bf16.mxu0 0
        %555 = vmatpush1.bf16.msra.mxu0 %v533
        %556 = vmatprep.subr.bf16.mxu0 0
        %557 = vmatpush1.bf16.msra.mxu0 %v534
        %558 = vmatprep.subr.bf16.mxu0 0
        %559 = vmatpush1.bf16.msra.mxu0 %v535
        %560 = vmatprep.subr.bf16.mxu0 0
        %561 = vmatpush1.bf16.msra.mxu0 0
        %562 = vmatprep.subr.bf16.mxu0 0
        %563 = vmatpush1.bf16.msra.mxu0 0
        %564 = vmatprep.subr.bf16.mxu0 0
        %565 = vmatpush1.bf16.msra.mxu0 0
        %566 = vmatprep.subr.bf16.mxu0 0
        %567 = vmatpush1.bf16.msra.mxu0 0
        %568 = vmatprep.subr.bf16.mxu0 0
        %569 = vmatpush1.bf16.msra.mxu0 0
        %570 = vmatprep.subr.bf16.mxu0 0
        %571 = vmatpush1.bf16.msra.mxu0 0
        %572 = vmatprep.subr.bf16.mxu0 0
        %573 = vmatpush1.bf16.msra.mxu0 0
        %574 = vmatprep.subr.bf16.mxu0 0
        %575 = vmatpush1.bf16.msra.mxu0 0
        %576 = vmatprep.mubr.bf16.mxu0 0
        %577 = vmatmul.mubr.bf16.gmra.mrb[0].mxu0 %v479
        %v578 = vpop.f32.mrb[0].mxu0
        %v579 = vadd.f32 0.0, %v578
        %v580 = vpop.f32.mrb[0].mxu0
        %v581 = vpop.f32.mrb[0].mxu0
        %v582 = vadd.f32 0.0, %v581
        %v583 = vpop.f32.mrb[0].mxu0
        %584 = vdwg.mxu0
        %v585 = vpack.c.bf16 %v582, %v579
        %v586 = vld [vmem:[%s346] sm:$0xf]
        %v587 = vld [vmem:[%s346 + $0x4] sm:$0xf]
        %v588 = vld [vmem:[%s346 + $0x8] sm:$0xf]
        %v589 = vld [vmem:[%s346 + $0xc] sm:$0xf]
        %v590 = vld [vmem:[%s346 + $0x10] sm:$0xf]
        %v591 = vld [vmem:[%s346 + $0x14] sm:$0xf]
        %v592 = vld [vmem:[%s346 + $0x18] sm:$0xf]
        %v593 = vld [vmem:[%s346 + $0x1c] sm:$0xf]
        %v594 = vld [vmem:[%s346 + $0x20] sm:$0xf]
        %v595 = vld [vmem:[%s346 + $0x24] sm:$0xf]
        %v596 = vld [vmem:[%s346 + $0x28] sm:$0xf]
        %v597 = vld [vmem:[%s346 + $0x2c] sm:$0xf]
        %v598 = vld [vmem:[%s346 + $0x30] sm:$0xf]
        %v599 = vld [vmem:[%s346 + $0x34] sm:$0xf]
        %v600 = vld [vmem:[%s346 + $0x38] sm:$0xf]
        %v601 = vld [vmem:[%s346 + $0x3c] sm:$0xf]
        %v602 = vld [vmem:[%s421] sm:$0x1]
        %v604 = vlaneseq
        %v605 = vshrl.u32 %v604, 7
        %v606 = vsub.s32 0, %v605
        %v607 = vrot.slane %v602, %v606
        %v625 = vunpack.c.l.b16 %v586
        %v626 = vunpack.c.l.b16 %v587
        %v627 = vunpack.c.l.b16 %v588
        %v628 = vunpack.c.l.b16 %v589
        %v629 = vunpack.c.l.b16 %v590
        %v630 = vunpack.c.l.b16 %v591
        %v631 = vunpack.c.l.b16 %v592
        %v632 = vunpack.c.l.b16 %v593
        %v633 = vunpack.c.l.b16 %v594
        %v634 = vunpack.c.l.b16 %v595
        %v635 = vunpack.c.l.b16 %v596
        %v636 = vunpack.c.l.b16 %v597
        %v637 = vunpack.c.l.b16 %v598
        %v638 = vunpack.c.l.b16 %v599
        %v639 = vunpack.c.l.b16 %v600
        %v640 = vunpack.c.l.b16 %v601
        %v641 = vpack.c.b16 %v626, %v625
        %v642 = vpack.c.b16 %v628, %v627
        %v643 = vpack.c.b16 %v630, %v629
        %v644 = vpack.c.b16 %v632, %v631
        %v645 = vpack.c.b16 %v634, %v633
        %v646 = vpack.c.b16 %v636, %v635
        %v647 = vpack.c.b16 %v638, %v637
        %v648 = vpack.c.b16 %v640, %v639
        %657 = vmatprep.subr.bf16.mxu0 0
        %658 = vmatpush1.bf16.msra.mxu0 %v641
        %659 = vmatprep.subr.bf16.mxu0 0
        %660 = vmatpush1.bf16.msra.mxu0 %v642
        %661 = vmatprep.subr.bf16.mxu0 0
        %662 = vmatpush1.bf16.msra.mxu0 %v643
        %663 = vmatprep.subr.bf16.mxu0 0
        %664 = vmatpush1.bf16.msra.mxu0 %v644
        %665 = vmatprep.subr.bf16.mxu0 0
        %666 = vmatpush1.bf16.msra.mxu0 %v645
        %667 = vmatprep.subr.bf16.mxu0 0
        %668 = vmatpush1.bf16.msra.mxu0 %v646
        %669 = vmatprep.subr.bf16.mxu0 0
        %670 = vmatpush1.bf16.msra.mxu0 %v647
        %671 = vmatprep.subr.bf16.mxu0 0
        %672 = vmatpush1.bf16.msra.mxu0 %v648
        %673 = vmatprep.subr.bf16.mxu0 0
        %674 = vmatpush1.bf16.msra.mxu0 0
        %675 = vmatprep.subr.bf16.mxu0 0
        %676 = vmatpush1.bf16.msra.mxu0 0
        %677 = vmatprep.subr.bf16.mxu0 0
        %678 = vmatpush1.bf16.msra.mxu0 0
        %679 = vmatprep.subr.bf16.mxu0 0
        %680 = vmatpush1.bf16.msra.mxu0 0
        %681 = vmatprep.subr.bf16.mxu0 0
        %682 = vmatpush1.bf16.msra.mxu0 0
        %683 = vmatprep.subr.bf16.mxu0 0
        %684 = vmatpush1.bf16.msra.mxu0 0
        %685 = vmatprep.subr.bf16.mxu0 0
        %686 = vmatpush1.bf16.msra.mxu0 0
        %687 = vmatprep.subr.bf16.mxu0 0
        %688 = vmatpush1.bf16.msra.mxu0 0
        %689 = vmatprep.mubr.bf16.mxu0 0
        %690 = vmatmul.mubr.bf16.gmra.mrb[0].mxu0 %v585
        %v691 = vpop.f32.mrb[0].mxu0
        %v692 = vadd.f32 %v607, %v691
        %v693 = vpop.f32.mrb[0].mxu0
        %v694 = vpop.f32.mrb[0].mxu0
        %v695 = vadd.f32 %v607, %v694
        %v696 = vpop.f32.mrb[0].mxu0
        %697 = vdwg.mxu0
        %v698 = vmax.f32 %v692, 0.0
        %v699 = vmax.f32 %v695, 0.0
        %v700 = vpack.c.bf16 %v699, %v698
        %v701 = vld [vmem:[%s355] sm:$0xf]
        %v702 = vld [vmem:[%s355 + $0x4] sm:$0xf]
        %v703 = vld [vmem:[%s355 + $0x8] sm:$0xf]
        %v704 = vld [vmem:[%s355 + $0xc] sm:$0xf]
        %v705 = vld [vmem:[%s355 + $0x10] sm:$0xf]
        %v706 = vld [vmem:[%s355 + $0x14] sm:$0xf]
        %v707 = vld [vmem:[%s355 + $0x18] sm:$0xf]
        %v708 = vld [vmem:[%s355 + $0x1c] sm:$0xf]
        %v709 = vld [vmem:[%s355 + $0x20] sm:$0xf]
        %v710 = vld [vmem:[%s355 + $0x24] sm:$0xf]
        %v711 = vld [vmem:[%s355 + $0x28] sm:$0xf]
        %v712 = vld [vmem:[%s355 + $0x2c] sm:$0xf]
        %v713 = vld [vmem:[%s355 + $0x30] sm:$0xf]
        %v714 = vld [vmem:[%s355 + $0x34] sm:$0xf]
        %v715 = vld [vmem:[%s355 + $0x38] sm:$0xf]
        %v716 = vld [vmem:[%s355 + $0x3c] sm:$0xf]
        %v717 = vld [vmem:[%s424] sm:$0x1]
        %v719 = vlaneseq
        %v720 = vshrl.u32 %v719, 7
        %v721 = vsub.s32 0, %v720
        %v722 = vrot.slane %v717, %v721
        %v740 = vunpack.c.l.b16 %v701
        %v741 = vunpack.c.l.b16 %v702
        %v742 = vunpack.c.l.b16 %v703
        %v743 = vunpack.c.l.b16 %v704
        %v744 = vunpack.c.l.b16 %v705
        %v745 = vunpack.c.l.b16 %v706
        %v746 = vunpack.c.l.b16 %v707
        %v747 = vunpack.c.l.b16 %v708
        %v748 = vunpack.c.l.b16 %v709
        %v749 = vunpack.c.l.b16 %v710
        %v750 = vunpack.c.l.b16 %v711
        %v751 = vunpack.c.l.b16 %v712
        %v752 = vunpack.c.l.b16 %v713
        %v753 = vunpack.c.l.b16 %v714
        %v754 = vunpack.c.l.b16 %v715
        %v755 = vunpack.c.l.b16 %v716
        %v756 = vpack.c.b16 %v741, %v740
        %v757 = vpack.c.b16 %v743, %v742
        %v758 = vpack.c.b16 %v745, %v744
        %v759 = vpack.c.b16 %v747, %v746
        %v760 = vpack.c.b16 %v749, %v748
        %v761 = vpack.c.b16 %v751, %v750
        %v762 = vpack.c.b16 %v753, %v752
        %v763 = vpack.c.b16 %v755, %v754
        %772 = vmatprep.subr.bf16.mxu0 0
        %773 = vmatpush1.bf16.msra.mxu0 %v756
        %774 = vmatprep.subr.bf16.mxu0 0
        %775 = vmatpush1.bf16.msra.mxu0 %v757
        %776 = vmatprep.subr.bf16.mxu0 0
        %777 = vmatpush1.bf16.msra.mxu0 %v758
        %778 = vmatprep.subr.bf16.mxu0 0
        %779 = vmatpush1.bf16.msra.mxu0 %v759
        %780 = vmatprep.subr.bf16.mxu0 0
        %781 = vmatpush1.bf16.msra.mxu0 %v760
        %782 = vmatprep.subr.bf16.mxu0 0
        %783 = vmatpush1.bf16.msra.mxu0 %v761
        %784 = vmatprep.subr.bf16.mxu0 0
        %785 = vmatpush1.bf16.msra.mxu0 %v762
        %786 = vmatprep.subr.bf16.mxu0 0
        %787 = vmatpush1.bf16.msra.mxu0 %v763
        %788 = vmatprep.subr.bf16.mxu0 0
        %789 = vmatpush1.bf16.msra.mxu0 0
        %790 = vmatprep.subr.bf16.mxu0 0
        %791 = vmatpush1.bf16.msra.mxu0 0
        %792 = vmatprep.subr.bf16.mxu0 0
        %793 = vmatpush1.bf16.msra.mxu0 0
        %794 = vmatprep.subr.bf16.mxu0 0
        %795 = vmatpush1.bf16.msra.mxu0 0
        %796 = vmatprep.subr.bf16.mxu0 0
        %797 = vmatpush1.bf16.msra.mxu0 0
        %798 = vmatprep.subr.bf16.mxu0 0
        %799 = vmatpush1.bf16.msra.mxu0 0
        %800 = vmatprep.subr.bf16.mxu0 0
        %801 = vmatpush1.bf16.msra.mxu0 0
        %802 = vmatprep.subr.bf16.mxu0 0
        %803 = vmatpush1.bf16.msra.mxu0 0
        %804 = vmatprep.mubr.bf16.mxu0 0
        %805 = vmatmul.mubr.bf16.gmra.mrb[0].mxu0 %v700
        %v806 = vpop.f32.mrb[0].mxu0
        %v807 = vadd.f32 %v722, %v806
        %v808 = vpop.f32.mrb[0].mxu0
        %v809 = vpop.f32.mrb[0].mxu0
        %v810 = vadd.f32 %v722, %v809
        %v811 = vpop.f32.mrb[0].mxu0
        %812 = vdwg.mxu0
        %v813 = vmax.f32 %v807, 0.0
        %v814 = vmax.f32 %v810, 0.0
        %815 = vst [vmem:[%s408] sm:$0xff] %v813
        %816 = vst [vmem:[%s408 + $0x8] sm:$0xff] %v814
        %s817 = sand.u32 %s206, 1
        %s818 = scalar_lea.sflag [#allocation4], %s817
        %s819 = sand.u32 %s206, 1
        %s820 = smul.addr %s819, 16
        %s821 = scalar_lea.vmem [#allocation8], %s820
        // Predicated region
        $region57: #{tpu_custom_call.1} parent=43 // pred_check
          %p822 = pneg %p216
        $region58: #{tpu_custom_call.1} parent=43 // pred_check_branch
          %824 = sbr.rel (%p822) target = $region60
        $region59: #{tpu_custom_call.1} parent=43 // pred_region
          %s825 = smul.u32 2, %s31
          %s827 = ssub.s32 256, 256
          %828 = vsyncadd %s818, %s827
          %s829 = smul.addr %s30, 2
          %s830 = sadd.s32 %s825, %s829
          %s831 = smul.addr %s830, 128
          %s832 = scalar_lea.hbm %s6, %s831
          %s833 = sshll.u32 %s821, 4
          %s834 = int_to_ptr.vmem [resolvable:$true] %s833
          %839 = dma.vmem_to_hbm [thread:$0]  %s834, 256, %s832, %s818, 128, 128, 8
        $region60: #{tpu_custom_call.1} parent=43 // pred_fallthru
          _
      $region44: #{tpu_custom_call.1} parent=5 // pred_fallthru
        _
      %p840 = scmp.le.s32.totalorder 2, %s21
      // Predicated region
      $region61: #{tpu_custom_call.1} parent=5 // pred_check
        %p841 = pneg %p840
      $region62: #{tpu_custom_call.1} parent=5 // pred_check_branch
        %843 = sbr.rel (%p841) target = $region64
      $region63: #{tpu_custom_call.1} parent=5 // pred_region
        %s844 = ssub.s32 %s21, 2
        // Predicated region
        $region65: #{tpu_custom_call.1} parent=63 // pred_check
          %p845 = pneg %p222
        $region66: #{tpu_custom_call.1} parent=63 // pred_check_branch
          %847 = sbr.rel (%p845) target = $region68
        $region67: #{tpu_custom_call.1} parent=63 // pred_region
          %s848 = sand.u32 %s207, 1
          %s849 = scalar_lea.sflag [#allocation4], %s848
          %s850 = sand.u32 %s207, 1
          %s851 = smul.addr %s850, 16
          %s852 = scalar_lea.vmem [#allocation8], %s851
          %853 = dma.done %s849, 256
        $region68: #{tpu_custom_call.1} parent=63 // pred_fallthru
          _
      $region64: #{tpu_custom_call.1} parent=5 // pred_fallthru
        _
    $region6: #{tpu_custom_call.1} parent=1 // loop_footer
      %s25 = sadd.s32 1, %s21
    $region7: #{tpu_custom_call.1} parent=1 // loop_footer_branch
      %20 = sbr.rel target = $region3
    $region8: #{tpu_custom_call.1} parent=1 // loop_exit
      _
    %854 = vsyncpa [#allocation3], 1
    %s855 = scalar_lea.sflag [#allocation3], 1
    %856 = vsyncpa %s855, 1
    %857 = vsyncpa [#allocation6], 1
    %s858 = scalar_lea.sflag [#allocation6], 1
    %859 = vsyncpa %s858, 1
    %860 = vsyncpa [#allocation4], 1
    %s861 = scalar_lea.sflag [#allocation4], 1
    %862 = vsyncpa %s861, 1

</llo_original>
